<compile_context>
chip_gen: v7x
topology: tpu7x:2x2x1
jax: 0.10.0
libtpu: 0.0.40
codegen_flags: <defaults>
</compile_context>

<pallas_src>
import jax
import jax.numpy as jnp
import numpy as np
from jax.experimental import pallas as pl
from jax.experimental.pallas import tpu as pltpu


# ----------------------------------------------------------------------------
# Parameter setup (plain JAX): deterministic orthogonal filters, Gram-Schmidt.
# ----------------------------------------------------------------------------
def _gram_schmidt(vecs: jnp.ndarray) -> jnp.ndarray:
    """Classic Gram-Schmidt on rows of `vecs` (shape (n, d)), each row unit-norm."""
    outs = []
    for i in range(vecs.shape[0]):
        x = vecs[i]
        for y in outs:
            x = x - (jnp.dot(y, x) / jnp.dot(y, y)) * y
        x = x / jnp.linalg.norm(x)
        outs.append(x)
    return jnp.stack(outs)


def initialize_orthogonal_filters(c: int, h: int, w: int, key) -> jnp.ndarray:
    """Returns (c, h, w) orthogonalized filters, mirroring the PyTorch init."""
    if h * w < c:
        n = c // (h * w)
        keys = jax.random.split(key, n)
        grams = [_gram_schmidt(jax.random.uniform(k, (h * w, h * w))) for k in keys]
        filt = jnp.concatenate(grams, axis=0)
    else:
        filt = _gram_schmidt(jax.random.uniform(key, (c, h * w)))
    return filt.reshape(c, h, w).astype(jnp.float32)


def _adaptive_pool_matrix(in_size: int, out_size: int) -> jnp.ndarray:
    """(out_size, in_size) matrix M with M @ v == adaptive_avg_pool1d(v, out_size).

    Matches torch.nn.functional.adaptive_avg_pool2d window rules (including the
    non-divisible and upsampling cases)."""
    m = np.zeros((out_size, in_size), dtype=np.float32)
    for p in range(out_size):
        start = (p * in_size) // out_size
        end = -((-(p + 1) * in_size) // out_size)  # ceil((p+1)*in/out)
        m[p, start:end] = 1.0 / (end - start)
    return jnp.asarray(m)


# ----------------------------------------------------------------------------
# Pallas kernel: per-channel weighted spatial sum (HBM-bandwidth bound).
# ----------------------------------------------------------------------------
def _gst_kernel(x_ref, f_ref, o_ref):
    # x_ref: (TB, TC, hw) native dtype | f_ref: (TC, hw) f32 | o_ref: (TB, TC) f32
    x = x_ref[...].astype(jnp.float32)          # upcast in VMEM, not in HBM
    f = f_ref[...]
    # Per-channel dot (diagonal): VPU multiply + lane-tree reduce; no MXU.
    o_ref[...] = jnp.sum(x * f[None, :, :], axis=-1)


def _choose_tiles(B, C, hw, x_itemsize, target_bytes):
    """Pick (tb, tc): one x block ~target_bytes, obeying the (8,128) block rule
    (tb in {B} or a multiple of 8, tc in {C} or a multiple of 128), and both
    evenly dividing their dimension so the grid has no ragged blocks."""
    itemsize = max(int(x_itemsize), 1)

    def x_block_bytes(tb, tc):
        return tb * tc * hw * itemsize

    tc = C
    if C % 128 == 0 and x_block_bytes(1, C) > target_bytes:
        tc = 128
        while tc * 2 <= C and C % (tc * 2) == 0 and x_block_bytes(1, tc * 2) <= target_bytes:
            tc *= 2

    tb = B
    if x_block_bytes(B, tc) > target_bytes and B % 8 == 0:
        tb = 8
        while tb * 2 <= B and B % (tb * 2) == 0 and x_block_bytes(tb * 2, tc) <= target_bytes:
            tb *= 2

    return tb, tc


def gram_schmidt_transform_forward(x: jnp.ndarray,
                                   constant_filter: jnp.ndarray,
                                   *,
                                   target_block_bytes: int = 6 * 1024 * 1024) -> jnp.ndarray:
    """
    x: (B, C, H, W) or (B, C, H) in its native dtype; constant_filter: (C, Hf, Wf) f32.
    returns: (B, C, 1, 1) float32.
    """
    if x.ndim == 3:
        x = x[..., None]
    B, C, H, W = x.shape
    Cf, Hf, Wf = constant_filter.shape
    assert C == Cf, (C, Cf)

    filt = constant_filter.astype(jnp.float32)
    if (H, W) != (Hf, Wf):
        # Fuse adaptive_avg_pool2d into the (tiny) filter so the kernel reads
        # full-resolution x exactly once:
        #   sum_pq F[c,p,q]*(A_h x A_w^T)[b,c,p,q] == sum_ij (A_h^T F A_w)[c,i,j]*x[b,c,i,j]
        a_h = _adaptive_pool_matrix(H, Hf)  # (Hf, H)
        a_w = _adaptive_pool_matrix(W, Wf)  # (Wf, W)
        filt = jnp.einsum("ph,cpq,qw->chw", a_h, filt, a_w)

    hw = H * W
    x_flat = x.reshape(B, C, hw)            # contiguous collapse: free, keeps native dtype
    f_flat = filt.reshape(C, hw)

    tb, tc = _choose_tiles(B, C, hw, x.dtype.itemsize, target_block_bytes)
    grid = (C // tc, B // tb)               # C-tiles outer ⇒ filter block stays resident

    out = pl.pallas_call(
        _gst_kernel,
        out_shape=jax.ShapeDtypeStruct((B, C), jnp.float32),
        grid=grid,
        in_specs=[
            pl.BlockSpec((tb, tc, hw), lambda ci, bi: (bi, ci, 0)),
            pl.BlockSpec((tc, hw), lambda ci, bi: (ci, 0)),   # constant along inner axis
        ],
        out_specs=pl.BlockSpec((tb, tc), lambda ci, bi: (bi, ci)),
        compiler_params=pltpu.CompilerParams(
            dimension_semantics=("parallel", "parallel"),
            vmem_limit_bytes=48 * 1024 * 1024,
        ),
        cost_estimate=pl.CostEstimate(
            flops=2 * B * C * hw,
            transcendentals=0,
            bytes_accessed=B * C * hw * int(x.dtype.itemsize) + C * hw * 4 + B * C * 4,
        ),
    )(x_flat, f_flat)

    return out.reshape(B, C, 1, 1)


# ----------------------------------------------------------------------------
if __name__ == "__main__":
    key = jax.random.PRNGKey(0)
    k_filter, k_x, k_x2, k_x3 = jax.random.split(key, 4)

    B, C, H = 2, 4, 16
    constant_filter = initialize_orthogonal_filters(C, H, H, k_filter)  # (C, H, H)

    # 1) exact-size path, f32
    x = jax.random.normal(k_x, (B, C, H, H), dtype=jnp.float32)
    out = jax.block_until_ready(gram_schmidt_transform_forward(x, constant_filter))
    ref = (constant_filter[None] * x).sum(axis=(-1, -2), keepdims=True)
    assert out.shape == (B, C, 1, 1)
    assert jnp.allclose(out, ref, atol=1e-5, rtol=1e-5)

    # 2) adaptive-avg-pool path (32x32 -> 16x16), fused into the filter
    x2 = jax.random.normal(k_x2, (B, C, 2 * H, 2 * H), dtype=jnp.float32)
    out2 = jax.block_until_ready(gram_schmidt_transform_forward(x2, constant_filter))
    x2p = x2.reshape(B, C, H, 2, H, 2).mean(axis=(3, 5))
    ref2 = (constant_filter[None] * x2p).sum(axis=(-1, -2), keepdims=True)
    assert jnp.allclose(out2, ref2, atol=1e-4, rtol=1e-4)

    # 3) native bf16 input (DMA'd as bf16, upcast to f32 inside the kernel)
    x_bf = x.astype(jnp.bfloat16)
    out_bf = jax.block_until_ready(gram_schmidt_transform_forward(x_bf, constant_filter))
    ref_bf = (constant_filter[None] * x_bf.astype(jnp.float32)).sum(axis=(-1, -2), keepdims=True)
    assert jnp.allclose(out_bf, ref_bf, atol=1e-4, rtol=1e-4)

    # 4) 3-D input path (B, C, H): unsqueezed to width 1, adaptively "pooled" up
    x3 = jax.random.normal(k_x3, (B, C, H), dtype=jnp.float32)
    out3 = jax.block_until_ready(gram_schmidt_transform_forward(x3, constant_filter))
    ref3 = (constant_filter[None] * x3[..., None]).sum(axis=(-1, -2), keepdims=True)
    assert jnp.allclose(out3, ref3, atol=1e-4, rtol=1e-4)

    print("KERNEL_OK")
</pallas_src>

<mosaic_0001>
module attributes {stable_mosaic.version = 11 : i64} {
  func.func @_gst_kernel(%arg0: i32, %arg1: i32, %arg2: memref<2x4x256xf32, #tpu.memory_space<vmem>>, %arg3: memref<4x256xf32, #tpu.memory_space<vmem>>, %arg4: memref<2x4xf32, #tpu.memory_space<vmem>>) attributes {dimension_semantics = [#tpu.dimension_semantics<parallel>, #tpu.dimension_semantics<parallel>], iteration_bounds = array<i64: 1, 1>, scalar_prefetch = 0 : i64, scratch_operands = 0 : i64, tpu.core_type = #tpu.core_type<tc>, window_params = [{transform_indices = @transform_0, window_bounds = array<i64: 2, 4, 256>}, {transform_indices = @transform_1, window_bounds = array<i64: 4, 256>}, {transform_indices = @transform_2, window_bounds = array<i64: 2, 4>}]} {
    %c0 = arith.constant 0 : index
    %c0_0 = arith.constant 0 : index
    %c0_1 = arith.constant 0 : index
    %0 = vector.load %arg2[%c0, %c0_0, %c0_1] : memref<2x4x256xf32, #tpu.memory_space<vmem>>, vector<2x4x256xf32>
    %c0_2 = arith.constant 0 : index
    %c0_3 = arith.constant 0 : index
    %1 = vector.load %arg3[%c0_2, %c0_3] : memref<4x256xf32, #tpu.memory_space<vmem>>, vector<4x256xf32>
    %2 = vector.shape_cast %1 : vector<4x256xf32> to vector<1x4x256xf32>
    %3 = vector.broadcast %2 : vector<1x4x256xf32> to vector<2x4x256xf32>
    %4 = arith.mulf %0, %3 : vector<2x4x256xf32>
    %cst = arith.constant dense<0.000000e+00> : vector<2x4xf32>
    %5 = vector.multi_reduction <add>, %4, %cst [2] : vector<2x4x256xf32> to vector<2x4xf32>
    %c0_4 = arith.constant 0 : index
    %c0_5 = arith.constant 0 : index
    %6 = vector.load %arg4[%c0_4, %c0_5] : memref<2x4xf32, #tpu.memory_space<vmem>>, vector<2x4xf32>
    tpu.vector_store %arg4[%c0_4, %c0_5], %5 {strides = array<i32>} : memref<2x4xf32, #tpu.memory_space<vmem>>, vector<2x4xf32>,
    return
  }
  func.func @transform_0(%arg0: i32, %arg1: i32) -> (i32, i32, i32) {
    %c0_i32 = arith.constant 0 : i32
    %c0_i32_0 = arith.constant 0 : i32
    return %arg1, %arg0, %c0_i32 : i32, i32, i32
  }
  func.func @transform_1(%arg0: i32, %arg1: i32) -> (i32, i32) {
    %c0_i32 = arith.constant 0 : i32
    %c0_i32_0 = arith.constant 0 : i32
    return %arg0, %c0_i32 : i32, i32
  }
  func.func @transform_2(%arg0: i32, %arg1: i32) -> (i32, i32) {
    %c0_i32 = arith.constant 0 : i32
    return %arg1, %arg0 : i32, i32
  }
}

</mosaic_0001>

<llo_original>
// kernel: tpu_custom_call.1
$region0: #{tpu_custom_call.1}
  #allocation0 [shape = 'u32[]', space=smem, size = 0x4, offset = 0x4, fixed_abs, tag = 'smem constant byte address 0x4 - core index']
  #allocation1 [shape = 'u32[144,128]{1,0:T(1,128)}', space=vmem, size = 0x12000, scoped, tag = 'internal scratch']
  %s0 = inlined_call_operand.hbm [shape: f32[2,4,256], index: 0, kind: input, shape index: {}]
  %s1 = inlined_call_operand.hbm [shape: f32[4,256], index: 1, kind: input, shape index: {}]
  %s2 = inlined_call_operand.hbm [shape: f32[2,4], index: 2, kind: output, shape index: {}]
  %s3 = sld [smem:[#allocation0]]
  $region26: #{tpu_custom_call.1} parent=0
    _
  %s5 = ssub.s32 1, %s3
  %s6 = scalar_select 0, %s5, %s3
  $region1: #{tpu_custom_call.1} parent=0
    #allocation2 [shape = 'u8[8192]{0}', space=vmem, size = 0x2000, scoped, tag = 'input window, operand 0, single buffered']
    #allocation3 [shape = 's32[1]{0}', space=sflag, size = 0x4, scoped, tag = 'scoped memory for tpu_custom_call.1']
    #allocation4 [shape = 's32[1]{0}', space=sflag, size = 0x4, scoped, tag = 'scoped memory for tpu_custom_call.1']
    #allocation5 [shape = 'u8[4096]{0}', space=vmem, size = 0x1000, scoped, tag = 'input window, operand 1, single buffered']
    #allocation6 [shape = 's32[1]{0}', space=sflag, size = 0x4, scoped, tag = 'scoped memory for tpu_custom_call.1']
    #allocation7 [shape = 'u8[1024]{0}', space=vmem, size = 0x400, scoped, tag = 'output window, operand 0, single buffered']
    %7 = vsyncpa [#allocation3], 0
    %8 = vsyncpa [#allocation6], 0
    %9 = vsyncpa [#allocation4], 0
    // Predicated region
    $region2: #{tpu_custom_call.1} parent=1 // pred_check
      _
    $region3: #{tpu_custom_call.1} parent=1 // pred_check_branch
      %11 = sbr.rel (0) target = $region5
    $region4: #{tpu_custom_call.1} parent=1 // pred_region
      %s13 = ssub.s32 256, 256
      %14 = vsyncadd [#allocation3], %s13
      %s15 = sshll.u32 [#allocation2], 4
      %s16 = int_to_ptr.vmem [resolvable:$true] %s15
      %21 = dma.hbm_to_vmem [thread:$0]  %s0, 256, %s16, [#allocation3], 128, 128, 8
    $region5: #{tpu_custom_call.1} parent=1 // pred_fallthru
      _
    // Predicated region
    $region6: #{tpu_custom_call.1} parent=1 // pred_check
      _
    $region7: #{tpu_custom_call.1} parent=1 // pred_check_branch
      %23 = sbr.rel (0) target = $region9
    $region8: #{tpu_custom_call.1} parent=1 // pred_region
      %s25 = ssub.s32 128, 128
      %26 = vsyncadd [#allocation6], %s25
      %s28 = sshll.u32 [#allocation5], 4
      %s29 = int_to_ptr.vmem [resolvable:$true] %s28
      %31 = dma.hbm_to_vmem [thread:$0]  %s1, 128, %s29, [#allocation6]
    $region9: #{tpu_custom_call.1} parent=1 // pred_fallthru
      _
    // Predicated region
    $region10: #{tpu_custom_call.1} parent=1 // pred_check
      _
    $region11: #{tpu_custom_call.1} parent=1 // pred_check_branch
      %33 = sbr.rel (0) target = $region13
    $region12: #{tpu_custom_call.1} parent=1 // pred_region
      %34 = dma.done [#allocation3], 256
    $region13: #{tpu_custom_call.1} parent=1 // pred_fallthru
      _
    // Predicated region
    $region14: #{tpu_custom_call.1} parent=1 // pred_check
      _
    $region15: #{tpu_custom_call.1} parent=1 // pred_check_branch
      %36 = sbr.rel (0) target = $region17
    $region16: #{tpu_custom_call.1} parent=1 // pred_region
      %37 = dma.done [#allocation6], 128
    $region17: #{tpu_custom_call.1} parent=1 // pred_fallthru
      _
    %v38 = vld [vmem:[#allocation2] sm:$0xff]
    %v39 = vld [vmem:[#allocation2 + $0x8] sm:$0xff]
    %v40 = vld [vmem:[#allocation5] sm:$0xff]
    %v41 = vmul.f32 %v38, %v40
    %v42 = vmul.f32 %v39, %v40
    %v45 = vcombine.high %v41, %v41
    %v46 = vcombine.high %v42, %v42
    %vm49 = vcmask 1043456
    %v50 = vsel %vm49, %v41, 0.0
    %v51 = vsel %vm49, %v45, 0.0
    %v52 = vadd.f32 %v50, %v51
    %53 = vadd.xlane.f32.xlu0 %v52
    %v54 = vpop.xlane.xlu0 %53
    %v55 = vsel %vm49, %v42, 0.0
    %v56 = vsel %vm49, %v46, 0.0
    %v57 = vadd.f32 %v55, %v56
    %58 = vadd.xlane.f32.xlu0 %v57
    %v59 = vpop.xlane.xlu0 %58
    %v62 = vlaneseq
    %v63 = vand.u32 %v62, 127
    %v64 = vlaneseq
    %v65 = vshrl.u32 %v64, 7
    %v66 = vsub.s32 %v63, %v65
    %v67 = vrot.slane %v54, %v66
    %v68 = vlaneseq
    %v69 = vshrl.u32 %v68, 7
    %v70 = vsub.s32 %v63, %v69
    %v71 = vrot.slane %v59, %v70
    %vm72 = vcmask 1041409
    %v73 = vsel %vm72, %v71, %v67
    %vm75 = vcmask 25600
    %76 = vst.msk [vmem:[#allocation7] sm:$0x3] %vm75, %v73
    // Predicated region
    $region18: #{tpu_custom_call.1} parent=1 // pred_check
      _
    $region19: #{tpu_custom_call.1} parent=1 // pred_check_branch
      %78 = sbr.rel (0) target = $region21
    $region20: #{tpu_custom_call.1} parent=1 // pred_region
      %s80 = ssub.s32 32, 32
      %81 = vsyncadd [#allocation4], %s80
      %s83 = sshll.u32 [#allocation7], 4
      %s84 = int_to_ptr.vmem [resolvable:$true] %s83
      %86 = dma.vmem_to_hbm [thread:$0]  %s84, 32, %s2, [#allocation4]
    $region21: #{tpu_custom_call.1} parent=1 // pred_fallthru
      _
    // Predicated region
    $region22: #{tpu_custom_call.1} parent=1 // pred_check
      _
    $region23: #{tpu_custom_call.1} parent=1 // pred_check_branch
      %88 = sbr.rel (0) target = $region25
    $region24: #{tpu_custom_call.1} parent=1 // pred_region
      %89 = dma.done [#allocation4], 32
    $region25: #{tpu_custom_call.1} parent=1 // pred_fallthru
      _
    %90 = vsyncpa [#allocation3], 1
    %91 = vsyncpa [#allocation6], 1
    %92 = vsyncpa [#allocation4], 1

</llo_original>
